<compile_context>
chip_gen: v7x
topology: tpu7x:2x2x1
jax: 0.10.0
libtpu: 0.0.40
codegen_flags: <defaults>
</compile_context>

<pallas_src>
import functools

import jax
import jax.numpy as jnp
from jax.experimental import pallas as pl
from jax.experimental.pallas import tpu as pltpu

_SMOOTH = 1e-5


def _dice_partials_kernel(score_ref, labels_ref, inter_ref, z_ref, y_ref, *,
                          n_classes, hw, block_n, softmax):
    """Accumulate per-class partial sums for one (batch b, tile n) grid step.

    score_ref : (C, TN)  logits / probabilities tile
    labels_ref: (1, TN)  int32 class-id tile
    inter_ref, z_ref, y_ref : (C, 1) per-batch accumulators (output blocks,
        resident in VMEM across the whole n axis for a fixed b).
    """
    n = pl.program_id(1)

    # ---- zero this batch-row's accumulators on its first N tile ----
    @pl.when(n == 0)
    def _():
        inter_ref[...] = jnp.zeros_like(inter_ref)
        z_ref[...] = jnp.zeros_like(z_ref)
        y_ref[...] = jnp.zeros_like(y_ref)

    score = score_ref[...].astype(jnp.float32)        # (C, TN)
    labels = labels_ref[...]                          # (1, TN) int32

    if softmax:
        # softmax over the class axis (dim=1 of NCHW == sublane axis here)
        m = jnp.max(score, axis=0, keepdims=True)
        e = jnp.exp(score - m)                        # EUP
        denom = jnp.sum(e, axis=0, keepdims=True)
        score = e * pl.reciprocal(denom, approx=False)

    class_ids = jax.lax.broadcasted_iota(jnp.int32, (n_classes, block_n), 0)

    if hw % block_n != 0:
        # mask the padded tail of the last N-block
        col = n * block_n + jax.lax.broadcasted_iota(jnp.int32, (1, block_n), 1)
        valid = col < hw                              # (1, TN)
        onehot = jnp.logical_and(labels == class_ids, valid).astype(jnp.float32)
        score = jnp.where(valid, score, 0.0)
    else:
        onehot = (labels == class_ids).astype(jnp.float32)   # (C, TN)

    # per-class partial reductions for this tile (lane reduce -> XLU)
    # (t*t == t for one-hot, so y_sum is just sum(onehot))
    inter_ref[...] += jnp.sum(score * onehot, axis=-1, keepdims=True)   # (C, 1)
    z_ref[...] += jnp.sum(score * score, axis=-1, keepdims=True)        # (C, 1)
    y_ref[...] += jnp.sum(onehot, axis=-1, keepdims=True)               # (C, 1)


def _pick_block_n(hw, n_classes, vmem_block_budget_bytes=8 * 1024 * 1024):
    """Pick a lane-tile size: big enough to hit the HBM roofline, small enough
    that double-buffered (score + labels) blocks stay well under the scoped
    VMEM limits on every TPU generation (16 MiB v5e default, 32 MiB v7x)."""
    bytes_per_col = 4 * n_classes + 4          # f32 score rows + i32 labels row
    max_tn = max(128, (vmem_block_budget_bytes // (2 * bytes_per_col)) // 128 * 128)
    if hw <= max_tn:
        return hw                              # full row in one block (always legal)
    return max_tn                              # multiple of 128; tail masked in-kernel


def dice_loss(inputs, target, weight=None, softmax=False, block_n=None):
    """Pallas TPU equivalent of DiceLoss(C).forward(inputs, target, weight, softmax)."""
    B, C, H, W = inputs.shape
    HW = H * W

    # layout glue only: contiguous reshapes, no transpose, no f32 copy
    score = inputs.reshape(B, C, HW)
    labels = target.reshape(B, 1, HW)
    if labels.dtype != jnp.int32:
        labels = labels.astype(jnp.int32)

    if weight is None:
        weight = [1.0] * C
    w = jnp.asarray(weight, dtype=jnp.float32)         # (C,)

    if block_n is None:
        block_n = _pick_block_n(HW, C)
    assert block_n == HW or block_n % 128 == 0, \
        "block_n must equal H*W or be a multiple of 128"
    num_n_blocks = (HW + block_n - 1) // block_n

    kernel = functools.partial(_dice_partials_kernel, n_classes=C, hw=HW,
                               block_n=block_n, softmax=softmax)

    part_shape = jax.ShapeDtypeStruct((B, C, 1), jnp.float32)
    part_spec = pl.BlockSpec((None, C, 1), lambda b, n: (b, 0, 0))

    inter_b, z_b, y_b = pl.pallas_call(
        kernel,
        out_shape=(part_shape, part_shape, part_shape),
        grid=(B, num_n_blocks),
        in_specs=[
            pl.BlockSpec((None, C, block_n), lambda b, n: (b, 0, n)),   # score tile (C, TN)
            pl.BlockSpec((None, 1, block_n), lambda b, n: (b, 0, n)),   # labels tile (1, TN)
        ],
        out_specs=(part_spec, part_spec, part_spec),
        compiler_params=pltpu.CompilerParams(
            # batch axis is independent across output blocks -> megacore-shardable
            # (v7x: 2 TCs each stream half the batch); N axis carries the accumulator.
            dimension_semantics=("parallel", "arbitrary")),
    )(score, labels)

    # tiny O(B*C) epilogue: cross-batch reduce + dice formula + weighted mean
    inter = jnp.sum(inter_b[:, :, 0], axis=0)          # (C,)
    z_sum = jnp.sum(z_b[:, :, 0], axis=0)              # (C,)
    y_sum = jnp.sum(y_b[:, :, 0], axis=0)              # (C,)
    dice = 1.0 - (2.0 * inter + _SMOOTH) / (z_sum + y_sum + _SMOOTH)
    return jnp.sum(dice * w) / jnp.float32(C)


def _dice_loss_ref(inputs, target, weight=None, softmax=False):
    """Pure-JAX reference mirroring the PyTorch module exactly."""
    B, C, H, W = inputs.shape
    x = inputs.astype(jnp.float32)
    if softmax:
        x = jax.nn.softmax(x, axis=1)
    if weight is None:
        weight = [1.0] * C
    smooth = 1e-5
    loss = jnp.float32(0.0)
    for i in range(C):
        s = x[:, i]
        t = (target == i).astype(jnp.float32)
        intersect = jnp.sum(s * t)
        y_sum = jnp.sum(t * t)
        z_sum = jnp.sum(s * s)
        dice = 1.0 - (2.0 * intersect + smooth) / (z_sum + y_sum + smooth)
        loss = loss + dice * weight[i]
    return loss / C


if __name__ == "__main__":
    key = jax.random.PRNGKey(0)
    k1, k2, k3, k4 = jax.random.split(key, 4)

    # Case 1: module defaults (softmax=False, weight=None)
    B, C, H, W = 2, 4, 16, 16
    inputs = jax.random.normal(k1, (B, C, H, W), dtype=jnp.float32)
    target = jax.random.randint(k2, (B, H, W), 0, C, dtype=jnp.int32)
    out = jax.block_until_ready(dice_loss(inputs, target))
    ref = _dice_loss_ref(inputs, target)
    assert jnp.allclose(out, ref, atol=1e-5, rtol=1e-5), (out, ref)

    # Case 2: softmax=True + explicit class weights, forced multi-block N grid
    w = [0.5, 1.0, 1.5, 2.0]
    out_sm = jax.block_until_ready(
        dice_loss(inputs, target, weight=w, softmax=True, block_n=128))
    ref_sm = _dice_loss_ref(inputs, target, weight=w, softmax=True)
    assert jnp.allclose(out_sm, ref_sm, atol=1e-5, rtol=1e-5), (out_sm, ref_sm)

    # Case 3: ragged H*W (160) with block_n=128 exercises the tail mask
    B2, C2, H2, W2 = 2, 4, 16, 10
    inputs2 = jax.random.normal(k3, (B2, C2, H2, W2), dtype=jnp.float32)
    target2 = jax.random.randint(k4, (B2, H2, W2), 0, C2, dtype=jnp.int32)
    out_t = jax.block_until_ready(
        dice_loss(inputs2, target2, softmax=True, block_n=128))
    ref_t = _dice_loss_ref(inputs2, target2, softmax=True)
    assert jnp.allclose(out_t, ref_t, atol=1e-5, rtol=1e-5), (out_t, ref_t)

    print("KERNEL_OK")
</pallas_src>

<mosaic_0001>
module attributes {stable_mosaic.version = 11 : i64} {
  func.func @_dice_partials_kernel(%arg0: i32, %arg1: i32, %arg2: memref<1x4x256xf32, #tpu.memory_space<vmem>>, %arg3: memref<1x1x256xi32, #tpu.memory_space<vmem>>, %arg4: memref<1x4x1xf32, #tpu.memory_space<vmem>>, %arg5: memref<1x4x1xf32, #tpu.memory_space<vmem>>, %arg6: memref<1x4x1xf32, #tpu.memory_space<vmem>>) attributes {dimension_semantics = [#tpu.dimension_semantics<parallel>, #tpu.dimension_semantics<arbitrary>], iteration_bounds = array<i64: 2, 1>, scalar_prefetch = 0 : i64, scratch_operands = 0 : i64, tpu.core_type = #tpu.core_type<tc>, window_params = [{transform_indices = @transform_0, window_bounds = array<i64: 1, 4, 256>}, {transform_indices = @transform_1, window_bounds = array<i64: 1, 1, 256>}, {transform_indices = @transform_2, window_bounds = array<i64: 1, 4, 1>}, {transform_indices = @transform_3, window_bounds = array<i64: 1, 4, 1>}, {transform_indices = @transform_4, window_bounds = array<i64: 1, 4, 1>}]} {
    %c0_i32 = arith.constant 0 : i32
    %0 = arith.cmpi eq, %arg1, %c0_i32 : i32
    %1 = arith.extui %0 : i1 to i32
    %c0_i32_0 = arith.constant 0 : i32
    %2 = arith.cmpi ne, %1, %c0_i32_0 : i32
    scf.if %2 {
      %cst_26 = arith.constant 0.000000e+00 : f32
      %38 = vector.broadcast %cst_26 : f32 to vector<4x1xf32>
      %c0_27 = arith.constant 0 : index
      %c0_28 = arith.constant 0 : index
      %c0_29 = arith.constant 0 : index
      %39 = vector.load %arg4[%c0_27, %c0_28, %c0_29] : memref<1x4x1xf32, #tpu.memory_space<vmem>>, vector<1x4x1xf32>
      %40 = vector.shape_cast %39 : vector<1x4x1xf32> to vector<4x1xf32>
      %41 = vector.shape_cast %38 : vector<4x1xf32> to vector<1x4x1xf32>
      tpu.vector_store %arg4[%c0_27, %c0_28, %c0_29], %41 {strides = array<i32>} : memref<1x4x1xf32, #tpu.memory_space<vmem>>, vector<1x4x1xf32>,
      %cst_30 = arith.constant 0.000000e+00 : f32
      %42 = vector.broadcast %cst_30 : f32 to vector<4x1xf32>
      %c0_31 = arith.constant 0 : index
      %c0_32 = arith.constant 0 : index
      %c0_33 = arith.constant 0 : index
      %43 = vector.load %arg5[%c0_31, %c0_32, %c0_33] : memref<1x4x1xf32, #tpu.memory_space<vmem>>, vector<1x4x1xf32>
      %44 = vector.shape_cast %43 : vector<1x4x1xf32> to vector<4x1xf32>
      %45 = vector.shape_cast %42 : vector<4x1xf32> to vector<1x4x1xf32>
      tpu.vector_store %arg5[%c0_31, %c0_32, %c0_33], %45 {strides = array<i32>} : memref<1x4x1xf32, #tpu.memory_space<vmem>>, vector<1x4x1xf32>,
      %cst_34 = arith.constant 0.000000e+00 : f32
      %46 = vector.broadcast %cst_34 : f32 to vector<4x1xf32>
      %c0_35 = arith.constant 0 : index
      %c0_36 = arith.constant 0 : index
      %c0_37 = arith.constant 0 : index
      %47 = vector.load %arg6[%c0_35, %c0_36, %c0_37] : memref<1x4x1xf32, #tpu.memory_space<vmem>>, vector<1x4x1xf32>
      %48 = vector.shape_cast %47 : vector<1x4x1xf32> to vector<4x1xf32>
      %49 = vector.shape_cast %46 : vector<4x1xf32> to vector<1x4x1xf32>
      tpu.vector_store %arg6[%c0_35, %c0_36, %c0_37], %49 {strides = array<i32>} : memref<1x4x1xf32, #tpu.memory_space<vmem>>, vector<1x4x1xf32>,
    } else {
    }
    %c0 = arith.constant 0 : index
    %c0_1 = arith.constant 0 : index
    %c0_2 = arith.constant 0 : index
    %3 = vector.load %arg2[%c0, %c0_1, %c0_2] : memref<1x4x256xf32, #tpu.memory_space<vmem>>, vector<1x4x256xf32>
    %4 = vector.shape_cast %3 : vector<1x4x256xf32> to vector<4x256xf32>
    %c0_3 = arith.constant 0 : index
    %c0_4 = arith.constant 0 : index
    %c0_5 = arith.constant 0 : index
    %5 = vector.load %arg3[%c0_3, %c0_4, %c0_5] : memref<1x1x256xi32, #tpu.memory_space<vmem>>, vector<1x1x256xi32>
    %6 = vector.shape_cast %5 : vector<1x1x256xi32> to vector<1x256xi32>
    %7 = tpu.iota {dimensions = array<i32: 0>} : vector<4x256xi32>
    %8 = vector.broadcast %6 : vector<1x256xi32> to vector<4x256xi32>
    %9 = arith.cmpi eq, %8, %7 : vector<4x256xi32>
    %10 = arith.extui %9 : vector<4x256xi1> to vector<4x256xi32>
    %11 = arith.sitofp %10 : vector<4x256xi32> to vector<4x256xf32>
    %c0_6 = arith.constant 0 : index
    %c0_7 = arith.constant 0 : index
    %c0_8 = arith.constant 0 : index
    %12 = vector.load %arg4[%c0_6, %c0_7, %c0_8] : memref<1x4x1xf32, #tpu.memory_space<vmem>>, vector<1x4x1xf32>
    %13 = vector.shape_cast %12 : vector<1x4x1xf32> to vector<4x1xf32>
    %14 = arith.mulf %4, %11 : vector<4x256xf32>
    %cst = arith.constant dense<0.000000e+00> : vector<4xf32>
    %15 = vector.multi_reduction <add>, %14, %cst [1] : vector<4x256xf32> to vector<4xf32>
    %16 = vector.shape_cast %15 : vector<4xf32> to vector<4x1xf32>
    %17 = arith.addf %13, %16 : vector<4x1xf32>
    %c0_9 = arith.constant 0 : index
    %c0_10 = arith.constant 0 : index
    %c0_11 = arith.constant 0 : index
    %18 = vector.load %arg4[%c0_9, %c0_10, %c0_11] : memref<1x4x1xf32, #tpu.memory_space<vmem>>, vector<1x4x1xf32>
    %19 = vector.shape_cast %18 : vector<1x4x1xf32> to vector<4x1xf32>
    %20 = vector.shape_cast %17 : vector<4x1xf32> to vector<1x4x1xf32>
    tpu.vector_store %arg4[%c0_9, %c0_10, %c0_11], %20 {strides = array<i32>} : memref<1x4x1xf32, #tpu.memory_space<vmem>>, vector<1x4x1xf32>,
    %c0_12 = arith.constant 0 : index
    %c0_13 = arith.constant 0 : index
    %c0_14 = arith.constant 0 : index
    %21 = vector.load %arg5[%c0_12, %c0_13, %c0_14] : memref<1x4x1xf32, #tpu.memory_space<vmem>>, vector<1x4x1xf32>
    %22 = vector.shape_cast %21 : vector<1x4x1xf32> to vector<4x1xf32>
    %23 = arith.mulf %4, %4 : vector<4x256xf32>
    %cst_15 = arith.constant dense<0.000000e+00> : vector<4xf32>
    %24 = vector.multi_reduction <add>, %23, %cst_15 [1] : vector<4x256xf32> to vector<4xf32>
    %25 = vector.shape_cast %24 : vector<4xf32> to vector<4x1xf32>
    %26 = arith.addf %22, %25 : vector<4x1xf32>
    %c0_16 = arith.constant 0 : index
    %c0_17 = arith.constant 0 : index
    %c0_18 = arith.constant 0 : index
    %27 = vector.load %arg5[%c0_16, %c0_17, %c0_18] : memref<1x4x1xf32, #tpu.memory_space<vmem>>, vector<1x4x1xf32>
    %28 = vector.shape_cast %27 : vector<1x4x1xf32> to vector<4x1xf32>
    %29 = vector.shape_cast %26 : vector<4x1xf32> to vector<1x4x1xf32>
    tpu.vector_store %arg5[%c0_16, %c0_17, %c0_18], %29 {strides = array<i32>} : memref<1x4x1xf32, #tpu.memory_space<vmem>>, vector<1x4x1xf32>,
    %c0_19 = arith.constant 0 : index
    %c0_20 = arith.constant 0 : index
    %c0_21 = arith.constant 0 : index
    %30 = vector.load %arg6[%c0_19, %c0_20, %c0_21] : memref<1x4x1xf32, #tpu.memory_space<vmem>>, vector<1x4x1xf32>
    %31 = vector.shape_cast %30 : vector<1x4x1xf32> to vector<4x1xf32>
    %cst_22 = arith.constant dense<0.000000e+00> : vector<4xf32>
    %32 = vector.multi_reduction <add>, %11, %cst_22 [1] : vector<4x256xf32> to vector<4xf32>
    %33 = vector.shape_cast %32 : vector<4xf32> to vector<4x1xf32>
    %34 = arith.addf %31, %33 : vector<4x1xf32>
    %c0_23 = arith.constant 0 : index
    %c0_24 = arith.constant 0 : index
    %c0_25 = arith.constant 0 : index
    %35 = vector.load %arg6[%c0_23, %c0_24, %c0_25] : memref<1x4x1xf32, #tpu.memory_space<vmem>>, vector<1x4x1xf32>
    %36 = vector.shape_cast %35 : vector<1x4x1xf32> to vector<4x1xf32>
    %37 = vector.shape_cast %34 : vector<4x1xf32> to vector<1x4x1xf32>
    tpu.vector_store %arg6[%c0_23, %c0_24, %c0_25], %37 {strides = array<i32>} : memref<1x4x1xf32, #tpu.memory_space<vmem>>, vector<1x4x1xf32>,
    return
  }
  func.func @transform_0(%arg0: i32, %arg1: i32) -> (i32, i32, i32) {
    %c0_i32 = arith.constant 0 : i32
    %c0_i32_0 = arith.constant 0 : i32
    return %arg0, %c0_i32, %arg1 : i32, i32, i32
  }
  func.func @transform_1(%arg0: i32, %arg1: i32) -> (i32, i32, i32) {
    %c0_i32 = arith.constant 0 : i32
    %c0_i32_0 = arith.constant 0 : i32
    return %arg0, %c0_i32, %arg1 : i32, i32, i32
  }
  func.func @transform_2(%arg0: i32, %arg1: i32) -> (i32, i32, i32) {
    %c0_i32 = arith.constant 0 : i32
    %c0_i32_0 = arith.constant 0 : i32
    %c0_i32_1 = arith.constant 0 : i32
    return %arg0, %c0_i32, %c0_i32_0 : i32, i32, i32
  }
  func.func @transform_3(%arg0: i32, %arg1: i32) -> (i32, i32, i32) {
    %c0_i32 = arith.constant 0 : i32
    %c0_i32_0 = arith.constant 0 : i32
    %c0_i32_1 = arith.constant 0 : i32
    return %arg0, %c0_i32, %c0_i32_0 : i32, i32, i32
  }
  func.func @transform_4(%arg0: i32, %arg1: i32) -> (i32, i32, i32) {
    %c0_i32 = arith.constant 0 : i32
    %c0_i32_0 = arith.constant 0 : i32
    %c0_i32_1 = arith.constant 0 : i32
    return %arg0, %c0_i32, %c0_i32_0 : i32, i32, i32
  }
}

</mosaic_0001>

<llo_original>
// kernel: tpu_custom_call.1
$region0: #{tpu_custom_call.1}
  #allocation0 [shape = 'u32[]', space=smem, size = 0x4, offset = 0x4, fixed_abs, tag = 'smem constant byte address 0x4 - core index']
  #allocation1 [shape = 'u32[144,128]{1,0:T(1,128)}', space=vmem, size = 0x12000, scoped, tag = 'internal scratch']
  %s0 = inlined_call_operand.hbm [shape: f32[2,4,256], index: 0, kind: input, shape index: {}]
  %s1 = inlined_call_operand.hbm [shape: s32[2,1,256], index: 1, kind: input, shape index: {}]
  %s2 = inlined_call_operand.vmem [shape: f32[2,4,1], index: 2, kind: output, shape index: {0}]
  %s3 = inlined_call_operand.vmem [shape: f32[2,4,1], index: 3, kind: output, shape index: {1}]
  %s4 = inlined_call_operand.vmem [shape: f32[2,4,1], index: 4, kind: output, shape index: {2}]
  %5 = xla_tuple %s2, %s3, %s4
  %s6 = sld [smem:[#allocation0]]
  $region69: #{tpu_custom_call.1} parent=0
    _
  %s8 = ssub.s32 1, %s6
  %s9 = scalar_select 0, %s8, %s6
  $region1: #{tpu_custom_call.1} parent=0
    #allocation2 [shape = 'u8[8192]{0}', space=vmem, size = 0x2000, scoped, tag = 'input window, operand 0']
    #allocation3 [shape = 's32[2]{0}', space=sflag, size = 0x8, scoped, tag = 'scoped memory for tpu_custom_call.1']
    #allocation4 [shape = 'u8[2048]{0}', space=vmem, size = 0x800, scoped, tag = 'input window, operand 1']
    #allocation5 [shape = 's32[2]{0}', space=sflag, size = 0x8, scoped, tag = 'scoped memory for tpu_custom_call.1']
    %10 = vsyncpa [#allocation3], 0
    %s11 = scalar_lea.sflag [#allocation3], 1
    %12 = vsyncpa %s11, 0
    %13 = vsyncpa [#allocation5], 0
    %s14 = scalar_lea.sflag [#allocation5], 1
    %15 = vsyncpa %s14, 0
    loop: start=0, step=1, limit=4
    $region2: #{tpu_custom_call.1} parent=1 // loop_pre_header
      _
    $region3: #{tpu_custom_call.1} parent=1 // loop_header
      %s17 = sphi 0, %s21
      %p18 = scmp.ge.s32.totalorder %s17, 4
      %s24 = sphi 0, %s36
      %s25 = sphi 0, %s32
      %s26 = sphi 0, %s24
      %s27 = sphi 0, %s25
      %s28 = sphi 0, %s26
      %s29 = sphi 0, %s27
      %s41 = sphi 0, %s43
      %s44 = sphi 0, %s41
      %s45 = sphi 0, %s44
      %s61 = sphi 0, %s45
      %s69 = sphi 0, %s71
      %s72 = sphi 0, %s69
      %s73 = sphi 0, %s72
      %s89 = sphi 0, %s73
      %s95 = sphi 0, %s97
      %s98 = sphi 0, %s95
      %s99 = sphi 0, %s98
      %s115 = sphi 0, %s99
      %s121 = sphi 0, %s123
      %s124 = sphi 0, %s121
      %s125 = sphi 0, %s124
      %s141 = sphi 0, %s125
      %s147 = sphi 0, %s149
      %s150 = sphi 0, %s147
      %s151 = sphi 0, %s150
      %s167 = sphi 0, %s151
    $region4: #{tpu_custom_call.1} parent=1 // loop_header_branch
      %20 = sbr.rel (%p18) target = $region8
    $region5: #{tpu_custom_call.1} parent=1 // loop_body
      %s22 = ssub.s32 %s17, 1
      %s23 = ssub.s32 %s17, 2
      %s30 = sadd.s32 1, %s25
      %p31 = scmp.ge.s32.totalorder %s30, 1
      %s32 = scalar_select %p31, 0, %s30
      %s33 = sadd.s32 1, %s24
      %s34 = scalar_select %p31, %s33, %s24
      %p35 = scmp.ge.s32.totalorder %s34, 2
      %s36 = scalar_select %p35, 0, %s34
      %s37 = ssub.s32 %s24, %s36
      %s38 = ssub.s32 %s25, %s32
      %s39 = sor.u32 %s37, %s38
      %p40 = scmp.eq.s32.totalorder %s39, 0
      %s42 = sadd.s32 %s41, 1
      %s43 = scalar_select %p40, %s41, %s42
      %p46 = pneg %p40
      %p47 = scmp.eq.s32.totalorder %s17, 1
      %p48 = por %p46, %p47
      %p49 = scmp.ne.s32.totalorder %s41, %s44
      %p50 = scmp.eq.s32.totalorder %s17, 0
      %p51 = por %p49, %p50
      %p52 = scmp.ne.s32.totalorder %s41, %s44
      %p53 = scmp.eq.s32.totalorder %s22, 1
      %p54 = por %p52, %p53
      %p55 = scmp.ne.s32.totalorder %s44, %s45
      %p56 = scmp.eq.s32.totalorder %s22, 0
      %p57 = por %p55, %p56
      %p58 = scmp.ne.s32.totalorder %s44, %s45
      %p59 = scmp.eq.s32.totalorder %s23, 1
      %p60 = por %p58, %p59
      %p62 = scmp.ne.s32.totalorder %s45, %s61
      %p63 = scmp.eq.s32.totalorder %s23, 0
      %p64 = por %p62, %p63
      %s65 = ssub.s32 %s24, %s36
      %s66 = ssub.s32 %s25, %s32
      %s67 = sor.u32 %s65, %s66
      %p68 = scmp.eq.s32.totalorder %s67, 0
      %s70 = sadd.s32 %s69, 1
      %s71 = scalar_select %p68, %s69, %s70
      %p74 = pneg %p68
      %p75 = scmp.eq.s32.totalorder %s17, 1
      %p76 = por %p74, %p75
      %p77 = scmp.ne.s32.totalorder %s69, %s72
      %p78 = scmp.eq.s32.totalorder %s17, 0
      %p79 = por %p77, %p78
      %p80 = scmp.ne.s32.totalorder %s69, %s72
      %p81 = scmp.eq.s32.totalorder %s22, 1
      %p82 = por %p80, %p81
      %p83 = scmp.ne.s32.totalorder %s72, %s73
      %p84 = scmp.eq.s32.totalorder %s22, 0
      %p85 = por %p83, %p84
      %p86 = scmp.ne.s32.totalorder %s72, %s73
      %p87 = scmp.eq.s32.totalorder %s23, 1
      %p88 = por %p86, %p87
      %p90 = scmp.ne.s32.totalorder %s73, %s89
      %p91 = scmp.eq.s32.totalorder %s23, 0
      %p92 = por %p90, %p91
      %s93 = ssub.s32 %s24, %s36
      %p94 = scmp.eq.s32.totalorder %s93, 0
      %s96 = sadd.s32 %s95, 1
      %s97 = scalar_select %p94, %s95, %s96
      %p100 = pneg %p94
      %p101 = scmp.eq.s32.totalorder %s17, 1
      %p102 = por %p100, %p101
      %p103 = scmp.ne.s32.totalorder %s95, %s98
      %p104 = scmp.eq.s32.totalorder %s17, 0
      %p105 = por %p103, %p104
      %p106 = scmp.ne.s32.totalorder %s95, %s98
      %p107 = scmp.eq.s32.totalorder %s22, 1
      %p108 = por %p106, %p107
      %p109 = scmp.ne.s32.totalorder %s98, %s99
      %p110 = scmp.eq.s32.totalorder %s22, 0
      %p111 = por %p109, %p110
      %p112 = scmp.ne.s32.totalorder %s98, %s99
      %p113 = scmp.eq.s32.totalorder %s23, 1
      %p114 = por %p112, %p113
      %p116 = scmp.ne.s32.totalorder %s99, %s115
      %p117 = scmp.eq.s32.totalorder %s23, 0
      %p118 = por %p116, %p117
      %s119 = ssub.s32 %s24, %s36
      %p120 = scmp.eq.s32.totalorder %s119, 0
      %s122 = sadd.s32 %s121, 1
      %s123 = scalar_select %p120, %s121, %s122
      %p126 = pneg %p120
      %p127 = scmp.eq.s32.totalorder %s17, 1
      %p128 = por %p126, %p127
      %p129 = scmp.ne.s32.totalorder %s121, %s124
      %p130 = scmp.eq.s32.totalorder %s17, 0
      %p131 = por %p129, %p130
      %p132 = scmp.ne.s32.totalorder %s121, %s124
      %p133 = scmp.eq.s32.totalorder %s22, 1
      %p134 = por %p132, %p133
      %p135 = scmp.ne.s32.totalorder %s124, %s125
      %p136 = scmp.eq.s32.totalorder %s22, 0
      %p137 = por %p135, %p136
      %p138 = scmp.ne.s32.totalorder %s124, %s125
      %p139 = scmp.eq.s32.totalorder %s23, 1
      %p140 = por %p138, %p139
      %p142 = scmp.ne.s32.totalorder %s125, %s141
      %p143 = scmp.eq.s32.totalorder %s23, 0
      %p144 = por %p142, %p143
      %s145 = ssub.s32 %s24, %s36
      %p146 = scmp.eq.s32.totalorder %s145, 0
      %s148 = sadd.s32 %s147, 1
      %s149 = scalar_select %p146, %s147, %s148
      %p152 = pneg %p146
      %p153 = scmp.eq.s32.totalorder %s17, 1
      %p154 = por %p152, %p153
      %p155 = scmp.ne.s32.totalorder %s147, %s150
      %p156 = scmp.eq.s32.totalorder %s17, 0
      %p157 = por %p155, %p156
      %p158 = scmp.ne.s32.totalorder %s147, %s150
      %p159 = scmp.eq.s32.totalorder %s22, 1
      %p160 = por %p158, %p159
      %p161 = scmp.ne.s32.totalorder %s150, %s151
      %p162 = scmp.eq.s32.totalorder %s22, 0
      %p163 = por %p161, %p162
      %p164 = scmp.ne.s32.totalorder %s150, %s151
      %p165 = scmp.eq.s32.totalorder %s23, 1
      %p166 = por %p164, %p165
      %p168 = scmp.ne.s32.totalorder %s151, %s167
      %p169 = scmp.eq.s32.totalorder %s23, 0
      %p170 = por %p168, %p169
      %p171 = scmp.le.s32.totalorder 1, %s17
      %p172 = scmp.lt.s32.totalorder %s17, 3
      %p173 = pnand %p171, %p172
      %p174 = pneg %p173
      // Predicated region
      $region9: #{tpu_custom_call.1} parent=5 // pred_check
        _
      $region10: #{tpu_custom_call.1} parent=5 // pred_check_branch
        %176 = sbr.rel (%p173) target = $region12
      $region11: #{tpu_custom_call.1} parent=5 // pred_region
        %s177 = ssub.s32 %s17, 1
      $region12: #{tpu_custom_call.1} parent=5 // pred_fallthru
        _
      %p178 = scmp.lt.s32.totalorder %s17, 2
      // Predicated region
      $region13: #{tpu_custom_call.1} parent=5 // pred_check
        %p179 = pneg %p178
      $region14: #{tpu_custom_call.1} parent=5 // pred_check_branch
        %181 = sbr.rel (%p179) target = $region16
      $region15: #{tpu_custom_call.1} parent=5 // pred_region
        // Predicated region
        $region17: #{tpu_custom_call.1} parent=15 // pred_check
          %p182 = pneg %p51
        $region18: #{tpu_custom_call.1} parent=15 // pred_check_branch
          %184 = sbr.rel (%p182) target = $region20
        $region19: #{tpu_custom_call.1} parent=15 // pred_region
          %s185 = sand.u32 %s41, 1
          %s186 = scalar_lea.sflag [#allocation3], %s185
          %s187 = sand.u32 %s41, 1
          %s188 = smul.addr %s187, 8
          %s189 = scalar_lea.vmem [#allocation2], %s188
          %s190 = smul.u32 2, %s25
          %s192 = ssub.s32 128, 128
          %193 = vsyncadd %s186, %s192
          %s194 = smul.addr %s24, 2
          %s195 = sadd.s32 %s190, %s194
          %s196 = smul.addr %s195, 64
          %s197 = scalar_lea.hbm %s0, %s196
          %s199 = sshll.u32 %s189, 4
          %s200 = int_to_ptr.vmem [resolvable:$true] %s199
          %202 = dma.hbm_to_vmem [thread:$0]  %s197, 128, %s200, %s186
        $region20: #{tpu_custom_call.1} parent=15 // pred_fallthru
          _
        // Predicated region
        $region21: #{tpu_custom_call.1} parent=15 // pred_check
          %p203 = pneg %p79
        $region22: #{tpu_custom_call.1} parent=15 // pred_check_branch
          %205 = sbr.rel (%p203) target = $region24
        $region23: #{tpu_custom_call.1} parent=15 // pred_region
          %s206 = sand.u32 %s69, 1
          %s207 = scalar_lea.sflag [#allocation5], %s206
          %s208 = sand.u32 %s69, 1
          %s209 = smul.addr %s208, 2
          %s210 = scalar_lea.vmem [#allocation4], %s209
          %s211 = smul.u32 2, %s25
          %s213 = ssub.s32 32, 32
          %214 = vsyncadd %s207, %s213
          %s215 = smul.addr %s24, 2
          %s216 = sadd.s32 %s211, %s215
          %s217 = smul.addr %s216, 16
          %s218 = scalar_lea.hbm %s1, %s217
          %s220 = sshll.u32 %s210, 4
          %s221 = int_to_ptr.vmem [resolvable:$true] %s220
          %223 = dma.hbm_to_vmem [thread:$0]  %s218, 32, %s221, %s207
        $region24: #{tpu_custom_call.1} parent=15 // pred_fallthru
          _
      $region16: #{tpu_custom_call.1} parent=5 // pred_fallthru
        _
      %p224 = scmp.le.s32.totalorder 1, %s17
      %p225 = scmp.lt.s32.totalorder %s17, 3
      %p226 = pnand %p224, %p225
      %p227 = pneg %p226
      // Predicated region
      $region25: #{tpu_custom_call.1} parent=5 // pred_check
        _
      $region26: #{tpu_custom_call.1} parent=5 // pred_check_branch
        %229 = sbr.rel (%p226) target = $region28
      $region27: #{tpu_custom_call.1} parent=5 // pred_region
        %s230 = ssub.s32 %s17, 1
        %s231 = sand.u32 %s44, 1
        %s232 = scalar_lea.sflag [#allocation3], %s231
        %s233 = sand.u32 %s44, 1
        %s234 = smul.addr %s233, 8
        %s235 = scalar_lea.vmem [#allocation2], %s234
        // Predicated region
        $region29: #{tpu_custom_call.1} parent=27 // pred_check
          %p236 = pneg %p57
        $region30: #{tpu_custom_call.1} parent=27 // pred_check_branch
          %238 = sbr.rel (%p236) target = $region32
        $region31: #{tpu_custom_call.1} parent=27 // pred_region
          %239 = dma.done %s232, 128
        $region32: #{tpu_custom_call.1} parent=27 // pred_fallthru
          _
        %s240 = sand.u32 %s72, 1
        %s241 = scalar_lea.sflag [#allocation5], %s240
        %s242 = sand.u32 %s72, 1
        %s243 = smul.addr %s242, 2
        %s244 = scalar_lea.vmem [#allocation4], %s243
        // Predicated region
        $region33: #{tpu_custom_call.1} parent=27 // pred_check
          %p245 = pneg %p85
        $region34: #{tpu_custom_call.1} parent=27 // pred_check_branch
          %247 = sbr.rel (%p245) target = $region36
        $region35: #{tpu_custom_call.1} parent=27 // pred_region
          %248 = dma.done %s241, 32
        $region36: #{tpu_custom_call.1} parent=27 // pred_fallthru
          _
        %s249 = sand.u32 %s44, 1
        %s250 = scalar_lea.sflag [#allocation3], %s249
        %s251 = sand.u32 %s44, 1
        %s252 = smul.addr %s251, 8
        %s253 = scalar_lea.vmem [#allocation2], %s252
        %p254 = pneg %p57
        %p255 = pneg %p54
        %s256 = sand.u32 %s72, 1
        %s257 = scalar_lea.sflag [#allocation5], %s256
        %s258 = sand.u32 %s72, 1
        %s259 = smul.addr %s258, 2
        %s260 = scalar_lea.vmem [#allocation4], %s259
        %p261 = pneg %p85
        %p262 = pneg %p82
        %p263 = pneg %p111
        %p264 = pneg %p108
        %p265 = scmp.lt.s32.totalorder %s26, 1
        %s266 = scalar_select %p265, %s26, 1
        %s267 = smul.addr %s266, 4
        %s268 = scalar_lea.vmem %s2, %s267
        %p269 = pneg %p137
        %p270 = pneg %p134
        %p271 = scmp.lt.s32.totalorder %s26, 1
        %s272 = scalar_select %p271, %s26, 1
        %s273 = smul.addr %s272, 4
        %s274 = scalar_lea.vmem %s3, %s273
        %p275 = pneg %p163
        %p276 = pneg %p160
        %p277 = scmp.lt.s32.totalorder %s26, 1
        %s278 = scalar_select %p277, %s26, 1
        %s279 = smul.addr %s278, 4
        %s280 = scalar_lea.vmem %s4, %s279
        %s281 = smul.u32 2, %s27
        %s282 = smul.u32 2, %s27
        %p283 = scmp.lt.s32.totalorder %s26, 1
        %s284 = scalar_select %p283, %s26, 1
        %s285 = smul.addr %s284, 4
        %s286 = scalar_lea.vmem %s2, %s285
        %p287 = scmp.lt.s32.totalorder %s26, 1
        %s288 = scalar_select %p287, %s26, 1
        %s289 = smul.addr %s288, 4
        %s290 = scalar_lea.vmem %s3, %s289
        %p291 = scmp.lt.s32.totalorder %s26, 1
        %s292 = scalar_select %p291, %s26, 1
        %s293 = smul.addr %s292, 4
        %s294 = scalar_lea.vmem %s4, %s293
        %p295 = scmp.eq.s32.totalorder %s27, 0
        // Predicated region
        $region37: #{tpu_custom_call.1} parent=27 // pred_check
          %p296 = pneg %p295
        $region38: #{tpu_custom_call.1} parent=27 // pred_check_branch
          %298 = sbr.rel (%p296) target = $region40
        $region39: #{tpu_custom_call.1} parent=27 // pred_region
          %vm299 = vcmask 3072
          %300 = vst.msk [vmem:[%s286] sm:$0xf] %vm299, 0.0
          %301 = vst.msk [vmem:[%s290] sm:$0xf] %vm299, 0.0
          %302 = vst.msk [vmem:[%s294] sm:$0xf] %vm299, 0.0
        $region40: #{tpu_custom_call.1} parent=27 // pred_fallthru
          _
        %v303 = vld [vmem:[%s235] sm:$0xff]
        %v304 = vld [vmem:[%s244] sm:$0x3]
        %v305 = vlaneseq
        %v306 = vshrl.u32 %v305, 7
        %v307 = vlaneseq
        %v308 = vshrl.u32 %v307, 7
        %v309 = vsub.s32 0, %v308
        %v310 = vrot.slane %v304, %v309
        %v311 = vlaneseq
        %v312 = vshrl.u32 %v311, 7
        %v313 = vsub.s32 1, %v312
        %v314 = vrot.slane %v304, %v313
        %vm315 = vcmp.eq.s32.totalorder %v310, %v306
        %vm316 = vcmp.eq.s32.totalorder %v314, %v306
        %v317 = vsel %vm315, 1, 0
        %v318 = vsel %vm316, 1, 0
        %v319 = vcvt.s32.f32 %v317
        %v320 = vcvt.s32.f32 %v318
        %v321 = vld [vmem:[%s286] sm:$0xf]
        %v324 = vcombine.low %v319, %v320
        %v326 = vmul.f32 %v303, %v324
        %v328 = vcombine.high %v326, %v326
        %vm330 = vcmask 1043456
        %v331 = vsel %vm330, %v326, 0.0
        %v332 = vsel %vm330, %v328, 0.0
        %v333 = vadd.f32 %v331, %v332
        %334 = vadd.xlane.f32.xlu0 %v333
        %v335 = vpop.xlane.xlu0 %334
        %v336 = vadd.f32 %v321, %v335
        %vm337 = vcmask 3072
        %338 = vst.msk [vmem:[%s286] sm:$0xf] %vm337, %v336
        %v339 = vld [vmem:[%s290] sm:$0xf]
        %v340 = vmul.f32 %v303, %v303
        %v342 = vcombine.high %v340, %v340
        %v344 = vsel %vm330, %v340, 0.0
        %v345 = vsel %vm330, %v342, 0.0
        %v346 = vadd.f32 %v344, %v345
        %347 = vadd.xlane.f32.xlu0 %v346
        %v348 = vpop.xlane.xlu0 %347
        %v349 = vadd.f32 %v339, %v348
        %350 = vst.msk [vmem:[%s290] sm:$0xf] %vm337, %v349
        %v351 = vld [vmem:[%s294] sm:$0xf]
        %v352 = vsel %vm330, %v319, 0.0
        %v353 = vsel %vm330, %v320, 0.0
        %v354 = vadd.f32 %v352, %v353
        %355 = vadd.xlane.f32.xlu0 %v354
        %v356 = vpop.xlane.xlu0 %355
        %v357 = vadd.f32 %v351, %v356
        %358 = vst.msk [vmem:[%s294] sm:$0xf] %vm337, %v357
        %p359 = scmp.lt.s32.totalorder %s26, 1
        %s360 = scalar_select %p359, %s26, 1
        %s361 = smul.addr %s360, 4
        %s362 = scalar_lea.vmem %s2, %s361
        %p363 = scmp.lt.s32.totalorder %s26, 1
        %s364 = scalar_select %p363, %s26, 1
        %s365 = smul.addr %s364, 4
        %s366 = scalar_lea.vmem %s3, %s365
        %p367 = scmp.lt.s32.totalorder %s26, 1
        %s368 = scalar_select %p367, %s26, 1
        %s369 = smul.addr %s368, 4
        %s370 = scalar_lea.vmem %s4, %s369
        // Predicated region
        $region41: #{tpu_custom_call.1} parent=27 // pred_check
          %p371 = pneg %p108
        $region42: #{tpu_custom_call.1} parent=27 // pred_check_branch
          %373 = sbr.rel (%p371) target = $region44
        $region43: #{tpu_custom_call.1} parent=27 // pred_region
          _
        $region44: #{tpu_custom_call.1} parent=27 // pred_fallthru
          _
        // Predicated region
        $region45: #{tpu_custom_call.1} parent=27 // pred_check
          %p374 = pneg %p134
        $region46: #{tpu_custom_call.1} parent=27 // pred_check_branch
          %376 = sbr.rel (%p374) target = $region48
        $region47: #{tpu_custom_call.1} parent=27 // pred_region
          _
        $region48: #{tpu_custom_call.1} parent=27 // pred_fallthru
          _
        // Predicated region
        $region49: #{tpu_custom_call.1} parent=27 // pred_check
          %p377 = pneg %p160
        $region50: #{tpu_custom_call.1} parent=27 // pred_check_branch
          %379 = sbr.rel (%p377) target = $region52
        $region51: #{tpu_custom_call.1} parent=27 // pred_region
          _
        $region52: #{tpu_custom_call.1} parent=27 // pred_fallthru
          _
      $region28: #{tpu_custom_call.1} parent=5 // pred_fallthru
        _
      %p380 = scmp.le.s32.totalorder 2, %s17
      // Predicated region
      $region53: #{tpu_custom_call.1} parent=5 // pred_check
        %p381 = pneg %p380
      $region54: #{tpu_custom_call.1} parent=5 // pred_check_branch
        %383 = sbr.rel (%p381) target = $region56
      $region55: #{tpu_custom_call.1} parent=5 // pred_region
        %s384 = ssub.s32 %s17, 2
        // Predicated region
        $region57: #{tpu_custom_call.1} parent=55 // pred_check
          %p385 = pneg %p114
        $region58: #{tpu_custom_call.1} parent=55 // pred_check_branch
          %387 = sbr.rel (%p385) target = $region60
        $region59: #{tpu_custom_call.1} parent=55 // pred_region
          %p388 = scmp.lt.s32.totalorder %s28, 1
          %s389 = scalar_select %p388, %s28, 1
          %s390 = smul.addr %s389, 4
          %s391 = scalar_lea.vmem %s2, %s390
        $region60: #{tpu_custom_call.1} parent=55 // pred_fallthru
          _
        // Predicated region
        $region61: #{tpu_custom_call.1} parent=55 // pred_check
          %p392 = pneg %p140
        $region62: #{tpu_custom_call.1} parent=55 // pred_check_branch
          %394 = sbr.rel (%p392) target = $region64
        $region63: #{tpu_custom_call.1} parent=55 // pred_region
          %p395 = scmp.lt.s32.totalorder %s28, 1
          %s396 = scalar_select %p395, %s28, 1
          %s397 = smul.addr %s396, 4
          %s398 = scalar_lea.vmem %s3, %s397
        $region64: #{tpu_custom_call.1} parent=55 // pred_fallthru
          _
        // Predicated region
        $region65: #{tpu_custom_call.1} parent=55 // pred_check
          %p399 = pneg %p166
        $region66: #{tpu_custom_call.1} parent=55 // pred_check_branch
          %401 = sbr.rel (%p399) target = $region68
        $region67: #{tpu_custom_call.1} parent=55 // pred_region
          %p402 = scmp.lt.s32.totalorder %s28, 1
          %s403 = scalar_select %p402, %s28, 1
          %s404 = smul.addr %s403, 4
          %s405 = scalar_lea.vmem %s4, %s404
        $region68: #{tpu_custom_call.1} parent=55 // pred_fallthru
          _
      $region56: #{tpu_custom_call.1} parent=5 // pred_fallthru
        _
    $region6: #{tpu_custom_call.1} parent=1 // loop_footer
      %s21 = sadd.s32 1, %s17
    $region7: #{tpu_custom_call.1} parent=1 // loop_footer_branch
      %16 = sbr.rel target = $region3
    $region8: #{tpu_custom_call.1} parent=1 // loop_exit
      _
    %406 = vsyncpa [#allocation3], 1
    %s407 = scalar_lea.sflag [#allocation3], 1
    %408 = vsyncpa %s407, 1
    %409 = vsyncpa [#allocation5], 1
    %s410 = scalar_lea.sflag [#allocation5], 1
    %411 = vsyncpa %s410, 1

</llo_original>
